<compile_context>
chip_gen: v5e
topology: v5e:2x2
jax: 0.10.0
libtpu: 0.0.40
codegen_flags: <defaults>
</compile_context>

<pallas_src>
import functools

import jax
import jax.numpy as jnp
from jax.experimental import pallas as pl
from jax.experimental.pallas import tpu as pltpu


# ----------------------------------------------------------------------------- kernel


def _generator_kernel(n_layers, matmul_dtype, *refs):
    """refs = (z_ref, [W_0, b_0, ..., W_{n_layers-1}, b_{n_layers-1}], o_ref).

    Layer i < n_layers-1 : h = leaky_relu_0.2(h @ W_i + b_i)   (BN already folded into W_i, b_i)
    Layer   n_layers-1   : o = h @ W + b                        (output projection)
    """
    z_ref = refs[0]
    o_ref = refs[-1]
    params = refs[1:-1]

    h = z_ref[...]                                            # (bm, latent) f32
    for l in range(n_layers):
        W, b = params[2 * l], params[2 * l + 1]
        # MXU matmul in matmul_dtype (bf16 by default), f32 accumulation.
        h = jnp.dot(h.astype(matmul_dtype), W[...],
                    preferred_element_type=jnp.float32) + b[...]
        if l < n_layers - 1:
            # LeakyReLU(0.2) on the f32 accumulator (VPU; f32 path on all generations).
            h = jnp.where(h > 0.0, h, 0.2 * h)
        # Dropout -> identity (eval mode).
    o_ref[...] = h.astype(o_ref.dtype)


# ----------------------------------------------------------------------------- helpers


def _round_up(x, m):
    return (x + m - 1) // m * m


def _cdiv(a, b):
    return -(-a // b)


def _pad_to(x, shape):
    pads = [(0, t - s) for s, t in zip(x.shape, shape)]
    if all(p == (0, 0) for p in pads):
        return x
    return jnp.pad(x, pads)


def init_params(key, latent_dim, output_dim, hidden_dims):
    """Deterministic synthetic parameters (shapes match nn.Linear / nn.BatchNorm1d)."""
    params = []
    prev = latent_dim
    for dim in hidden_dims:
        key, k_w, k_b, k_g, k_be, k_m, k_v = jax.random.split(key, 7)
        scale = 1.0 / jnp.sqrt(prev)
        params.append(dict(
            W=jax.random.uniform(k_w, (prev, dim), jnp.float32, -scale, scale),
            b=jax.random.uniform(k_b, (1, dim), jnp.float32, -scale, scale),
            gamma=1.0 + 0.1 * jax.random.normal(k_g, (1, dim), jnp.float32),
            beta=0.1 * jax.random.normal(k_be, (1, dim), jnp.float32),
            mean=0.1 * jax.random.normal(k_m, (1, dim), jnp.float32),
            var=jax.random.uniform(k_v, (1, dim), jnp.float32, 0.5, 1.5),
        ))
        prev = dim
    key, k_w, k_b = jax.random.split(key, 3)
    scale = 1.0 / jnp.sqrt(prev)
    out_params = dict(
        W=jax.random.uniform(k_w, (prev, output_dim), jnp.float32, -scale, scale),
        b=jax.random.uniform(k_b, (1, output_dim), jnp.float32, -scale, scale),
    )
    return params, out_params


# ----------------------------------------------------------------------------- param prep (one-time)


def prepare_generator_params(hidden_params, out_params, eps=1e-5,
                             matmul_dtype=jnp.bfloat16):
    """Fold eval-mode BN into the Linears, pad hidden feature dims to 128, cast weights.

    Returns [(W_0, b_0), ...] ready for the kernel.  Call once and reuse across forwards.
    """
    folded = []
    for p in hidden_params:
        s = p["gamma"] * jax.lax.rsqrt(p["var"] + eps)          # (1, dim)
        Wf = p["W"] * s                                         # scale output columns
        bf = (p["b"] - p["mean"]) * s + p["beta"]               # (1, dim)
        folded.append((Wf, bf))
    folded.append((out_params["W"], out_params["b"]))

    n_layers = len(folded)
    prepped = []
    for l, (W, b) in enumerate(folded):
        in_d, out_d = W.shape
        # Pad only the hidden (intermediate) feature dims to 128 lanes.  The true latent K of
        # layer 0 and true output N of the last layer stay unpadded so z / output stream
        # unpadded through HBM.  Zero pad lanes -> pre-act 0 -> LeakyReLU(0)=0 -> no leakage.
        in_p = in_d if l == 0 else _round_up(in_d, 128)
        out_p = out_d if l == n_layers - 1 else _round_up(out_d, 128)
        Wp = _pad_to(W, (in_p, out_p)).astype(matmul_dtype)
        bp = _pad_to(b, (1, out_p)).astype(jnp.float32)
        prepped.append((Wp, bp))
    return prepped


# ----------------------------------------------------------------------------- wrapper


def tabular_generator_forward(z, prepped, *, block_batch=512, out_dtype=jnp.float32):
    batch, latent_dim = z.shape
    assert prepped[0][0].shape[0] == latent_dim
    output_dim = prepped[-1][0].shape[1]
    n_layers = len(prepped)
    matmul_dtype = prepped[0][0].dtype

    # ---- balanced batch tiling (avoid remainder-tile waste) ----
    n_tiles = max(1, _cdiv(batch, block_batch))
    # v7x megacore: prefer >=2 tiles so the "parallel" axis shards across the 2 TensorCores.
    if n_tiles == 1 and batch >= 16:
        n_tiles = 2
    bm = _round_up(_cdiv(batch, n_tiles), 8)
    batch_p = bm * n_tiles

    z_p = z.astype(jnp.float32)
    if batch_p != batch:
        z_p = jnp.pad(z_p, ((0, batch_p - batch), (0, 0)))

    flat = [z_p]
    weight_specs = []
    for Wp, bp in prepped:
        flat += [Wp, bp]
        # Weights/biases: same block index at every grid step -> resident in VMEM.
        # (For very large hidden_dims on v7x, add pipeline_mode=pl.Buffered(1) here.)
        weight_specs += [
            pl.BlockSpec(Wp.shape, lambda i: (0, 0)),
            pl.BlockSpec(bp.shape, lambda i: (0, 0)),
        ]

    # z / output blocks: last dim equals the full (unpadded) array dim -> legal & lane-minimal.
    in_specs = [pl.BlockSpec((bm, latent_dim), lambda i: (i, 0))] + weight_specs
    out_specs = pl.BlockSpec((bm, output_dim), lambda i: (i, 0))

    # VMEM budget: resident params (x2 buffering) + double-buffered streamed tiles + live
    # intermediates + headroom.  Cap at 48 MiB to leave headroom on v7x's 64 MiB/TC.
    param_bytes = sum(int(x.size) * x.dtype.itemsize
                      for Wp, bp in prepped for x in (Wp, bp))
    stream_bytes = 2 * bm * (latent_dim + output_dim) * 4
    max_feat = max(Wp.shape[1] for Wp, _ in prepped)
    act_bytes = 4 * bm * max_feat * 4
    vmem_limit = int(min(max(2 * param_bytes + 2 * stream_bytes + act_bytes + (8 << 20),
                             16 << 20),
                         48 << 20))

    kernel = functools.partial(_generator_kernel, n_layers, matmul_dtype)
    out_p = pl.pallas_call(
        kernel,
        out_shape=jax.ShapeDtypeStruct((batch_p, output_dim), out_dtype),
        grid=(n_tiles,),
        in_specs=in_specs,
        out_specs=out_specs,
        compiler_params=pltpu.CompilerParams(
            dimension_semantics=("parallel",),
            vmem_limit_bytes=vmem_limit,
        ),
    )(*flat)

    return out_p if batch_p == batch else out_p[:batch]


# ----------------------------------------------------------------------------- references


def reference_forward(z, hidden_params, out_params, eps=1e-5):
    """Full-f32 reference (matches PyTorch eval-mode forward)."""
    h = z
    for p in hidden_params:
        h = h @ p["W"] + p["b"]
        h = (h - p["mean"]) / jnp.sqrt(p["var"] + eps) * p["gamma"] + p["beta"]
        h = jnp.where(h > 0, h, 0.2 * h)
    return h @ out_params["W"] + out_params["b"]


def matched_reference(z, prepped):
    """Reference doing the same bf16-matmul / f32-accumulate math as the kernel."""
    h = z.astype(jnp.float32)
    n = len(prepped)
    for l, (W, b) in enumerate(prepped):
        h = jnp.dot(h.astype(W.dtype), W, preferred_element_type=jnp.float32) + b
        if l < n - 1:
            h = jnp.where(h > 0, h, 0.2 * h)
    return h


# ----------------------------------------------------------------------------- main


if __name__ == "__main__":
    latent_dim = 16
    output_dim = 8
    hidden_dims = [32, 64, 32]
    batch = 8

    key = jax.random.PRNGKey(0)
    k_z, k_params = jax.random.split(key)
    z = jax.random.normal(k_z, (batch, latent_dim), jnp.float32)
    hidden_params, out_params = init_params(k_params, latent_dim, output_dim, hidden_dims)

    # One-time parameter prep (BN fold + pad + bf16 cast), reused across forward calls.
    prepped = prepare_generator_params(hidden_params, out_params)

    out = tabular_generator_forward(z, prepped)
    out = jax.block_until_ready(out)

    assert out.shape == (batch, output_dim)

    # Exact-math check against a reference using identical bf16-matmul / f32-accum arithmetic.
    ref_matched = matched_reference(z, prepped)
    assert jnp.allclose(out, ref_matched, atol=2e-3, rtol=2e-3), "mismatch vs matched reference"

    # Looser check against the full-f32 (PyTorch-equivalent) reference.
    ref_f32 = reference_forward(z, hidden_params, out_params)
    assert jnp.allclose(out, ref_f32, atol=5e-2, rtol=5e-2), "mismatch vs f32 reference"

    print("KERNEL_OK")
</pallas_src>

<mosaic_0001>
module attributes {stable_mosaic.version = 11 : i64} {
  func.func @_generator_kernel(%arg0: i32, %arg1: memref<8x16xf32, #tpu.memory_space<vmem>>, %arg2: memref<16x128xbf16, #tpu.memory_space<vmem>>, %arg3: memref<1x128xf32, #tpu.memory_space<vmem>>, %arg4: memref<128x128xbf16, #tpu.memory_space<vmem>>, %arg5: memref<1x128xf32, #tpu.memory_space<vmem>>, %arg6: memref<128x128xbf16, #tpu.memory_space<vmem>>, %arg7: memref<1x128xf32, #tpu.memory_space<vmem>>, %arg8: memref<128x8xbf16, #tpu.memory_space<vmem>>, %arg9: memref<1x8xf32, #tpu.memory_space<vmem>>, %arg10: memref<8x8xf32, #tpu.memory_space<vmem>>) attributes {dimension_semantics = [#tpu.dimension_semantics<parallel>], iteration_bounds = array<i64: 1>, scalar_prefetch = 0 : i64, scratch_operands = 0 : i64, tpu.core_type = #tpu.core_type<tc>, window_params = [{transform_indices = @transform_0, window_bounds = array<i64: 8, 16>}, {pipeline_mode = #tpu.pipeline_mode<synchronous>, transform_indices = @transform_1, window_bounds = array<i64: 16, 128>}, {pipeline_mode = #tpu.pipeline_mode<synchronous>, transform_indices = @transform_2, window_bounds = array<i64: 1, 128>}, {pipeline_mode = #tpu.pipeline_mode<synchronous>, transform_indices = @transform_3, window_bounds = array<i64: 128, 128>}, {pipeline_mode = #tpu.pipeline_mode<synchronous>, transform_indices = @transform_4, window_bounds = array<i64: 1, 128>}, {pipeline_mode = #tpu.pipeline_mode<synchronous>, transform_indices = @transform_5, window_bounds = array<i64: 128, 128>}, {pipeline_mode = #tpu.pipeline_mode<synchronous>, transform_indices = @transform_6, window_bounds = array<i64: 1, 128>}, {pipeline_mode = #tpu.pipeline_mode<synchronous>, transform_indices = @transform_7, window_bounds = array<i64: 128, 8>}, {pipeline_mode = #tpu.pipeline_mode<synchronous>, transform_indices = @transform_8, window_bounds = array<i64: 1, 8>}, {transform_indices = @transform_9, window_bounds = array<i64: 8, 8>}]} {
    %c0 = arith.constant 0 : index
    %c0_0 = arith.constant 0 : index
    %0 = vector.load %arg1[%c0, %c0_0] : memref<8x16xf32, #tpu.memory_space<vmem>>, vector<8x16xf32>
    %1 = arith.truncf %0 : vector<8x16xf32> to vector<8x16xbf16>
    %c0_1 = arith.constant 0 : index
    %c0_2 = arith.constant 0 : index
    %2 = vector.load %arg2[%c0_1, %c0_2] : memref<16x128xbf16, #tpu.memory_space<vmem>>, vector<16x128xbf16>
    %cst = arith.constant dense<0.000000e+00> : vector<8x128xf32>
    %3 = tpu.matmul %1, %2, %cst {dimension_numbers = #tpu.dot_dimension_numbers<[1], [0], [0], [1], [0, 0, 1, 1], [], []>} : vector<8x16xbf16>, vector<16x128xbf16>, vector<8x128xf32> -> vector<8x128xf32>
    %c0_3 = arith.constant 0 : index
    %c0_4 = arith.constant 0 : index
    %4 = vector.load %arg3[%c0_3, %c0_4] : memref<1x128xf32, #tpu.memory_space<vmem>>, vector<1x128xf32>
    %5 = vector.broadcast %4 : vector<1x128xf32> to vector<8x128xf32>
    %6 = arith.addf %3, %5 : vector<8x128xf32>
    %cst_5 = arith.constant 0.000000e+00 : f32
    %7 = vector.broadcast %cst_5 : f32 to vector<8x128xf32>
    %8 = arith.cmpf ogt, %6, %7 : vector<8x128xf32>
    %cst_6 = arith.constant 2.000000e-01 : f32
    %9 = vector.broadcast %cst_6 : f32 to vector<8x128xf32>
    %10 = arith.mulf %9, %6 : vector<8x128xf32>
    %11 = arith.select %8, %6, %10 : vector<8x128xi1>, vector<8x128xf32>
    %12 = arith.truncf %11 : vector<8x128xf32> to vector<8x128xbf16>
    %c0_7 = arith.constant 0 : index
    %c0_8 = arith.constant 0 : index
    %13 = vector.load %arg4[%c0_7, %c0_8] : memref<128x128xbf16, #tpu.memory_space<vmem>>, vector<128x128xbf16>
    %cst_9 = arith.constant dense<0.000000e+00> : vector<8x128xf32>
    %14 = tpu.matmul %12, %13, %cst_9 {dimension_numbers = #tpu.dot_dimension_numbers<[1], [0], [0], [1], [0, 0, 1, 1], [], []>} : vector<8x128xbf16>, vector<128x128xbf16>, vector<8x128xf32> -> vector<8x128xf32>
    %c0_10 = arith.constant 0 : index
    %c0_11 = arith.constant 0 : index
    %15 = vector.load %arg5[%c0_10, %c0_11] : memref<1x128xf32, #tpu.memory_space<vmem>>, vector<1x128xf32>
    %16 = vector.broadcast %15 : vector<1x128xf32> to vector<8x128xf32>
    %17 = arith.addf %14, %16 : vector<8x128xf32>
    %cst_12 = arith.constant 0.000000e+00 : f32
    %18 = vector.broadcast %cst_12 : f32 to vector<8x128xf32>
    %19 = arith.cmpf ogt, %17, %18 : vector<8x128xf32>
    %cst_13 = arith.constant 2.000000e-01 : f32
    %20 = vector.broadcast %cst_13 : f32 to vector<8x128xf32>
    %21 = arith.mulf %20, %17 : vector<8x128xf32>
    %22 = arith.select %19, %17, %21 : vector<8x128xi1>, vector<8x128xf32>
    %23 = arith.truncf %22 : vector<8x128xf32> to vector<8x128xbf16>
    %c0_14 = arith.constant 0 : index
    %c0_15 = arith.constant 0 : index
    %24 = vector.load %arg6[%c0_14, %c0_15] : memref<128x128xbf16, #tpu.memory_space<vmem>>, vector<128x128xbf16>
    %cst_16 = arith.constant dense<0.000000e+00> : vector<8x128xf32>
    %25 = tpu.matmul %23, %24, %cst_16 {dimension_numbers = #tpu.dot_dimension_numbers<[1], [0], [0], [1], [0, 0, 1, 1], [], []>} : vector<8x128xbf16>, vector<128x128xbf16>, vector<8x128xf32> -> vector<8x128xf32>
    %c0_17 = arith.constant 0 : index
    %c0_18 = arith.constant 0 : index
    %26 = vector.load %arg7[%c0_17, %c0_18] : memref<1x128xf32, #tpu.memory_space<vmem>>, vector<1x128xf32>
    %27 = vector.broadcast %26 : vector<1x128xf32> to vector<8x128xf32>
    %28 = arith.addf %25, %27 : vector<8x128xf32>
    %cst_19 = arith.constant 0.000000e+00 : f32
    %29 = vector.broadcast %cst_19 : f32 to vector<8x128xf32>
    %30 = arith.cmpf ogt, %28, %29 : vector<8x128xf32>
    %cst_20 = arith.constant 2.000000e-01 : f32
    %31 = vector.broadcast %cst_20 : f32 to vector<8x128xf32>
    %32 = arith.mulf %31, %28 : vector<8x128xf32>
    %33 = arith.select %30, %28, %32 : vector<8x128xi1>, vector<8x128xf32>
    %34 = arith.truncf %33 : vector<8x128xf32> to vector<8x128xbf16>
    %c0_21 = arith.constant 0 : index
    %c0_22 = arith.constant 0 : index
    %35 = vector.load %arg8[%c0_21, %c0_22] : memref<128x8xbf16, #tpu.memory_space<vmem>>, vector<128x8xbf16>
    %cst_23 = arith.constant dense<0.000000e+00> : vector<8x8xf32>
    %36 = tpu.matmul %34, %35, %cst_23 {dimension_numbers = #tpu.dot_dimension_numbers<[1], [0], [0], [1], [0, 0, 1, 1], [], []>} : vector<8x128xbf16>, vector<128x8xbf16>, vector<8x8xf32> -> vector<8x8xf32>
    %c0_24 = arith.constant 0 : index
    %c0_25 = arith.constant 0 : index
    %37 = vector.load %arg9[%c0_24, %c0_25] : memref<1x8xf32, #tpu.memory_space<vmem>>, vector<1x8xf32>
    %38 = vector.broadcast %37 : vector<1x8xf32> to vector<8x8xf32>
    %39 = arith.addf %36, %38 : vector<8x8xf32>
    %c0_26 = arith.constant 0 : index
    %c0_27 = arith.constant 0 : index
    %40 = vector.load %arg10[%c0_26, %c0_27] : memref<8x8xf32, #tpu.memory_space<vmem>>, vector<8x8xf32>
    tpu.vector_store %arg10[%c0_26, %c0_27], %39 {strides = array<i32>} : memref<8x8xf32, #tpu.memory_space<vmem>>, vector<8x8xf32>,
    return
  }
  func.func @transform_0(%arg0: i32) -> (i32, i32) {
    %c0_i32 = arith.constant 0 : i32
    %c0_i32_0 = arith.constant 0 : i32
    return %arg0, %c0_i32 : i32, i32
  }
  func.func @transform_1(%arg0: i32) -> (i32, i32) {
    %c0_i32 = arith.constant 0 : i32
    %c0_i32_0 = arith.constant 0 : i32
    %c0_i32_1 = arith.constant 0 : i32
    return %c0_i32, %c0_i32_0 : i32, i32
  }
  func.func @transform_2(%arg0: i32) -> (i32, i32) {
    %c0_i32 = arith.constant 0 : i32
    %c0_i32_0 = arith.constant 0 : i32
    %c0_i32_1 = arith.constant 0 : i32
    return %c0_i32, %c0_i32_0 : i32, i32
  }
  func.func @transform_3(%arg0: i32) -> (i32, i32) {
    %c0_i32 = arith.constant 0 : i32
    %c0_i32_0 = arith.constant 0 : i32
    %c0_i32_1 = arith.constant 0 : i32
    return %c0_i32, %c0_i32_0 : i32, i32
  }
  func.func @transform_4(%arg0: i32) -> (i32, i32) {
    %c0_i32 = arith.constant 0 : i32
    %c0_i32_0 = arith.constant 0 : i32
    %c0_i32_1 = arith.constant 0 : i32
    return %c0_i32, %c0_i32_0 : i32, i32
  }
  func.func @transform_5(%arg0: i32) -> (i32, i32) {
    %c0_i32 = arith.constant 0 : i32
    %c0_i32_0 = arith.constant 0 : i32
    %c0_i32_1 = arith.constant 0 : i32
    return %c0_i32, %c0_i32_0 : i32, i32
  }
  func.func @transform_6(%arg0: i32) -> (i32, i32) {
    %c0_i32 = arith.constant 0 : i32
    %c0_i32_0 = arith.constant 0 : i32
    %c0_i32_1 = arith.constant 0 : i32
    return %c0_i32, %c0_i32_0 : i32, i32
  }
  func.func @transform_7(%arg0: i32) -> (i32, i32) {
    %c0_i32 = arith.constant 0 : i32
    %c0_i32_0 = arith.constant 0 : i32
    %c0_i32_1 = arith.constant 0 : i32
    return %c0_i32, %c0_i32_0 : i32, i32
  }
  func.func @transform_8(%arg0: i32) -> (i32, i32) {
    %c0_i32 = arith.constant 0 : i32
    %c0_i32_0 = arith.constant 0 : i32
    %c0_i32_1 = arith.constant 0 : i32
    return %c0_i32, %c0_i32_0 : i32, i32
  }
  func.func @transform_9(%arg0: i32) -> (i32, i32) {
    %c0_i32 = arith.constant 0 : i32
    %c0_i32_0 = arith.constant 0 : i32
    return %arg0, %c0_i32 : i32, i32
  }
}

</mosaic_0001>

<llo_original>
// kernel: tpu_custom_call.1
$region0: #{tpu_custom_call.1}
  #allocation0 [shape = 'u32[]', space=smem, size = 0x4, offset = 0x4, fixed_abs, tag = 'smem constant byte address 0x4 - core index']
  #allocation1 [shape = 'u32[72,128]{1,0:T(1,128)}', space=vmem, size = 0x9000, scoped, tag = 'internal scratch']
  %s0 = inlined_call_operand.hbm [shape: f32[8,16], index: 0, kind: input, shape index: {}]
  %s1 = inlined_call_operand.hbm [shape: bf16[16,128], index: 1, kind: input, shape index: {}]
  %s2 = inlined_call_operand.vmem [shape: f32[1,128], index: 2, kind: input, shape index: {}]
  %s3 = inlined_call_operand.vmem [shape: bf16[128,128], index: 3, kind: input, shape index: {}]
  %s4 = inlined_call_operand.vmem [shape: f32[1,128], index: 4, kind: input, shape index: {}]
  %s5 = inlined_call_operand.hbm [shape: bf16[128,128], index: 5, kind: input, shape index: {}]
  %s6 = inlined_call_operand.vmem [shape: f32[1,128], index: 6, kind: input, shape index: {}]
  %s7 = inlined_call_operand.vmem [shape: bf16[128,8], index: 7, kind: input, shape index: {}]
  %s8 = inlined_call_operand.vmem [shape: f32[1,8], index: 8, kind: input, shape index: {}]
  %s9 = inlined_call_operand.hbm [shape: f32[8,8], index: 9, kind: output, shape index: {}]
  %s10 = sld [smem:[#allocation0]]
  $region58: #{tpu_custom_call.1} parent=0
    _
  %s12 = ssub.s32 1, %s10
  %s13 = scalar_select 0, %s12, %s10
  $region1: #{tpu_custom_call.1} parent=0
    #allocation2 [shape = 'u8[4096]{0}', space=vmem, size = 0x1000, scoped, tag = 'input window, operand 0, single buffered']
    #allocation3 [shape = 's32[1]{0}', space=sflag, size = 0x4, scoped, tag = 'scoped memory for tpu_custom_call.1']
    #allocation4 [shape = 's32[1]{0}', space=sflag, size = 0x4, scoped, tag = 'scoped memory for tpu_custom_call.1']
    #allocation5 [shape = 'u8[4096]{0}', space=vmem, size = 0x1000, scoped, tag = 'input window, operand 1, single buffered']
    #allocation6 [shape = 's32[1]{0}', space=sflag, size = 0x4, scoped, tag = 'scoped memory for tpu_custom_call.1']
    #allocation7 [shape = 'u8[32768]{0}', space=vmem, size = 0x8000, scoped, tag = 'input window, operand 5, single buffered']
    #allocation8 [shape = 'u8[4096]{0}', space=vmem, size = 0x1000, scoped, tag = 'output window, operand 0, single buffered']
    %14 = vsyncpa [#allocation3], 0
    %15 = vsyncpa [#allocation6], 0
    %16 = vsyncpa [#allocation4], 0
    // Predicated region
    $region2: #{tpu_custom_call.1} parent=1 // pred_check
      _
    $region3: #{tpu_custom_call.1} parent=1 // pred_check_branch
      %18 = sbr.rel (0) target = $region5
    $region4: #{tpu_custom_call.1} parent=1 // pred_region
      %20 = vsyncadd [#allocation3], 0
      %s22 = sshll.u32 %s0, 4
      %s23 = int_to_ptr.hbm [resolvable:$true] %s22
      %s24 = sshll.u32 [#allocation2], 4
      %s25 = int_to_ptr.vmem [resolvable:$true] %s24
      %27 = dma.hbm_to_vmem [thread:$0]  %s23, 128, %s25, [#allocation3]
    $region5: #{tpu_custom_call.1} parent=1 // pred_fallthru
      _
    // Predicated region
    $region6: #{tpu_custom_call.1} parent=1 // pred_check
      _
    $region7: #{tpu_custom_call.1} parent=1 // pred_check_branch
      %29 = sbr.rel (0) target = $region9
    $region8: #{tpu_custom_call.1} parent=1 // pred_region
      %31 = vsyncadd [#allocation6], 0
      %s32 = sshll.u32 %s1, 4
      %s33 = int_to_ptr.hbm [resolvable:$true] %s32
      %s34 = sshll.u32 [#allocation5], 4
      %s35 = int_to_ptr.vmem [resolvable:$true] %s34
      %40 = dma.hbm_to_vmem [thread:$0]  %s33, 128, %s35, [#allocation6], 64, 64, 4
    $region9: #{tpu_custom_call.1} parent=1 // pred_fallthru
      _
    // Predicated region
    $region10: #{tpu_custom_call.1} parent=1 // pred_check
      _
    $region11: #{tpu_custom_call.1} parent=1 // pred_check_branch
      %42 = sbr.rel (0) target = $region13
    $region12: #{tpu_custom_call.1} parent=1 // pred_region
      _
    $region13: #{tpu_custom_call.1} parent=1 // pred_fallthru
      _
    // Predicated region
    $region14: #{tpu_custom_call.1} parent=1 // pred_check
      _
    $region15: #{tpu_custom_call.1} parent=1 // pred_check_branch
      %44 = sbr.rel (0) target = $region17
    $region16: #{tpu_custom_call.1} parent=1 // pred_region
      _
    $region17: #{tpu_custom_call.1} parent=1 // pred_fallthru
      _
    // Predicated region
    $region18: #{tpu_custom_call.1} parent=1 // pred_check
      _
    $region19: #{tpu_custom_call.1} parent=1 // pred_check_branch
      %46 = sbr.rel (0) target = $region21
    $region20: #{tpu_custom_call.1} parent=1 // pred_region
      _
    $region21: #{tpu_custom_call.1} parent=1 // pred_fallthru
      _
    // Predicated region
    $region22: #{tpu_custom_call.1} parent=1 // pred_check
      _
    $region23: #{tpu_custom_call.1} parent=1 // pred_check_branch
      %48 = sbr.rel (0) target = $region25
    $region24: #{tpu_custom_call.1} parent=1 // pred_region
      %50 = vsyncadd [#allocation6], 0
      %s51 = sshll.u32 %s5, 4
      %s52 = int_to_ptr.hbm [resolvable:$true] %s51
      %s53 = sshll.u32 [#allocation7], 4
      %s54 = int_to_ptr.vmem [resolvable:$true] %s53
      %59 = dma.hbm_to_vmem [thread:$0]  %s52, 1024, %s54, [#allocation6], 64, 64, 4
    $region25: #{tpu_custom_call.1} parent=1 // pred_fallthru
      _
    // Predicated region
    $region26: #{tpu_custom_call.1} parent=1 // pred_check
      _
    $region27: #{tpu_custom_call.1} parent=1 // pred_check_branch
      %61 = sbr.rel (0) target = $region29
    $region28: #{tpu_custom_call.1} parent=1 // pred_region
      _
    $region29: #{tpu_custom_call.1} parent=1 // pred_fallthru
      _
    // Predicated region
    $region30: #{tpu_custom_call.1} parent=1 // pred_check
      _
    $region31: #{tpu_custom_call.1} parent=1 // pred_check_branch
      %63 = sbr.rel (0) target = $region33
    $region32: #{tpu_custom_call.1} parent=1 // pred_region
      _
    $region33: #{tpu_custom_call.1} parent=1 // pred_fallthru
      _
    // Predicated region
    $region34: #{tpu_custom_call.1} parent=1 // pred_check
      _
    $region35: #{tpu_custom_call.1} parent=1 // pred_check_branch
      %65 = sbr.rel (0) target = $region37
    $region36: #{tpu_custom_call.1} parent=1 // pred_region
      _
    $region37: #{tpu_custom_call.1} parent=1 // pred_fallthru
      _
    // Predicated region
    $region38: #{tpu_custom_call.1} parent=1 // pred_check
      _
    $region39: #{tpu_custom_call.1} parent=1 // pred_check_branch
      %67 = sbr.rel (0) target = $region41
    $region40: #{tpu_custom_call.1} parent=1 // pred_region
      %69 = dma.done [#allocation3], 128
    $region41: #{tpu_custom_call.1} parent=1 // pred_fallthru
      _
    // Predicated region
    $region42: #{tpu_custom_call.1} parent=1 // pred_check
      _
    $region43: #{tpu_custom_call.1} parent=1 // pred_check_branch
      %71 = sbr.rel (0) target = $region45
    $region44: #{tpu_custom_call.1} parent=1 // pred_region
      %73 = dma.done [#allocation6], 128
    $region45: #{tpu_custom_call.1} parent=1 // pred_fallthru
      _
    // Predicated region
    $region46: #{tpu_custom_call.1} parent=1 // pred_check
      _
    $region47: #{tpu_custom_call.1} parent=1 // pred_check_branch
      %75 = sbr.rel (0) target = $region49
    $region48: #{tpu_custom_call.1} parent=1 // pred_region
      %77 = dma.done [#allocation6], 1024
    $region49: #{tpu_custom_call.1} parent=1 // pred_fallthru
      _
    %v79 = vld [vmem:[#allocation2] sm:$0xff]
    %v80 = vpack.c.bf16 %v79, %v79
    %v81 = vld [vmem:[#allocation5] sm:$0xf]
    %v82 = vld [vmem:[#allocation5 + $0x4] sm:$0xf]
    %v83 = vld [vmem:[%s2] sm:$0x1]
    %v85 = vperm.slane %v83, 0
    %v89 = vunpack.c.l.b16 %v81
    %v90 = vunpack.c.l.b16 %v82
    %v91 = vpack.c.b16 %v90, %v89
    %vm93 = vcmask 130048
    %v95 = vsel %vm93, %v80, 0
    %97 = vmatpush.bf16.msra.mxu0 0
    %98 = vmatpush.bf16.msra.mxu0 0
    %99 = vmatpush.bf16.msra.mxu0 0
    %100 = vmatpush.bf16.msra.mxu0 0
    %101 = vmatpush.bf16.msra.mxu0 0
    %102 = vmatpush.bf16.msra.mxu0 0
    %103 = vmatpush.bf16.msra.mxu0 0
    %104 = vmatpush.bf16.msra.mxu0 %v91
    %105 = vmatmul.bf16.gmra.mxu0 %v95
    %v106 = vpop.f32.mrf.mxu0
    %v107 = vadd.f32 %v85, %v106
    %v108 = vpop.f32.mrf.mxu0
    %109 = vdwg.mxu0
    %vm110 = vcmp.gt.f32.partialorder %v107, 0.0
    %v111 = vmul.f32 %v107, 0.2
    %v112 = vsel %vm110, %v107, %v111
    %v113 = vpack.c.bf16 %v112, %v112
    %v114 = vld [vmem:[%s3] sm:$0xf]
    %v115 = vld [vmem:[%s3 + $0x4] sm:$0xf]
    %v116 = vld [vmem:[%s3 + $0x8] sm:$0xf]
    %v117 = vld [vmem:[%s3 + $0xc] sm:$0xf]
    %v118 = vld [vmem:[%s3 + $0x10] sm:$0xf]
    %v119 = vld [vmem:[%s3 + $0x14] sm:$0xf]
    %v120 = vld [vmem:[%s3 + $0x18] sm:$0xf]
    %v121 = vld [vmem:[%s3 + $0x1c] sm:$0xf]
    %v122 = vld [vmem:[%s3 + $0x20] sm:$0xf]
    %v123 = vld [vmem:[%s3 + $0x24] sm:$0xf]
    %v124 = vld [vmem:[%s3 + $0x28] sm:$0xf]
    %v125 = vld [vmem:[%s3 + $0x2c] sm:$0xf]
    %v126 = vld [vmem:[%s3 + $0x30] sm:$0xf]
    %v127 = vld [vmem:[%s3 + $0x34] sm:$0xf]
    %v128 = vld [vmem:[%s3 + $0x38] sm:$0xf]
    %v129 = vld [vmem:[%s3 + $0x3c] sm:$0xf]
    %v130 = vld [vmem:[%s4] sm:$0x1]
    %v132 = vperm.slane %v130, 0
    %v150 = vunpack.c.l.b16 %v114
    %v151 = vunpack.c.l.b16 %v115
    %v152 = vunpack.c.l.b16 %v116
    %v153 = vunpack.c.l.b16 %v117
    %v154 = vunpack.c.l.b16 %v118
    %v155 = vunpack.c.l.b16 %v119
    %v156 = vunpack.c.l.b16 %v120
    %v157 = vunpack.c.l.b16 %v121
    %v158 = vunpack.c.l.b16 %v122
    %v159 = vunpack.c.l.b16 %v123
    %v160 = vunpack.c.l.b16 %v124
    %v161 = vunpack.c.l.b16 %v125
    %v162 = vunpack.c.l.b16 %v126
    %v163 = vunpack.c.l.b16 %v127
    %v164 = vunpack.c.l.b16 %v128
    %v165 = vunpack.c.l.b16 %v129
    %v166 = vpack.c.b16 %v151, %v150
    %v167 = vpack.c.b16 %v153, %v152
    %v168 = vpack.c.b16 %v155, %v154
    %v169 = vpack.c.b16 %v157, %v156
    %v170 = vpack.c.b16 %v159, %v158
    %v171 = vpack.c.b16 %v161, %v160
    %v172 = vpack.c.b16 %v163, %v162
    %v173 = vpack.c.b16 %v165, %v164
    %182 = vmatpush.bf16.msra.mxu0 %v173
    %183 = vmatpush.bf16.msra.mxu0 %v172
    %184 = vmatpush.bf16.msra.mxu0 %v171
    %185 = vmatpush.bf16.msra.mxu0 %v170
    %186 = vmatpush.bf16.msra.mxu0 %v169
    %187 = vmatpush.bf16.msra.mxu0 %v168
    %188 = vmatpush.bf16.msra.mxu0 %v167
    %189 = vmatpush.bf16.msra.mxu0 %v166
    %190 = vmatmul.bf16.gmra.mxu0 %v113
    %v191 = vpop.f32.mrf.mxu0
    %v192 = vadd.f32 %v132, %v191
    %v193 = vpop.f32.mrf.mxu0
    %194 = vdwg.mxu0
    %vm195 = vcmp.gt.f32.partialorder %v192, 0.0
    %v196 = vmul.f32 %v192, 0.2
    %v197 = vsel %vm195, %v192, %v196
    %v198 = vpack.c.bf16 %v197, %v197
    %v199 = vld [vmem:[#allocation7] sm:$0xf]
    %v200 = vld [vmem:[#allocation7 + $0x4] sm:$0xf]
    %v201 = vld [vmem:[#allocation7 + $0x8] sm:$0xf]
    %v202 = vld [vmem:[#allocation7 + $0xc] sm:$0xf]
    %v203 = vld [vmem:[#allocation7 + $0x10] sm:$0xf]
    %v204 = vld [vmem:[#allocation7 + $0x14] sm:$0xf]
    %v205 = vld [vmem:[#allocation7 + $0x18] sm:$0xf]
    %v206 = vld [vmem:[#allocation7 + $0x1c] sm:$0xf]
    %v207 = vld [vmem:[#allocation7 + $0x20] sm:$0xf]
    %v208 = vld [vmem:[#allocation7 + $0x24] sm:$0xf]
    %v209 = vld [vmem:[#allocation7 + $0x28] sm:$0xf]
    %v210 = vld [vmem:[#allocation7 + $0x2c] sm:$0xf]
    %v211 = vld [vmem:[#allocation7 + $0x30] sm:$0xf]
    %v212 = vld [vmem:[#allocation7 + $0x34] sm:$0xf]
    %v213 = vld [vmem:[#allocation7 + $0x38] sm:$0xf]
    %v214 = vld [vmem:[#allocation7 + $0x3c] sm:$0xf]
    %v215 = vld [vmem:[%s6] sm:$0x1]
    %v217 = vperm.slane %v215, 0
    %v235 = vunpack.c.l.b16 %v199
    %v236 = vunpack.c.l.b16 %v200
    %v237 = vunpack.c.l.b16 %v201
    %v238 = vunpack.c.l.b16 %v202
    %v239 = vunpack.c.l.b16 %v203
    %v240 = vunpack.c.l.b16 %v204
    %v241 = vunpack.c.l.b16 %v205
    %v242 = vunpack.c.l.b16 %v206
    %v243 = vunpack.c.l.b16 %v207
    %v244 = vunpack.c.l.b16 %v208
    %v245 = vunpack.c.l.b16 %v209
    %v246 = vunpack.c.l.b16 %v210
    %v247 = vunpack.c.l.b16 %v211
    %v248 = vunpack.c.l.b16 %v212
    %v249 = vunpack.c.l.b16 %v213
    %v250 = vunpack.c.l.b16 %v214
    %v251 = vpack.c.b16 %v236, %v235
    %v252 = vpack.c.b16 %v238, %v237
    %v253 = vpack.c.b16 %v240, %v239
    %v254 = vpack.c.b16 %v242, %v241
    %v255 = vpack.c.b16 %v244, %v243
    %v256 = vpack.c.b16 %v246, %v245
    %v257 = vpack.c.b16 %v248, %v247
    %v258 = vpack.c.b16 %v250, %v249
    %267 = vmatpush.bf16.msra.mxu0 %v258
    %268 = vmatpush.bf16.msra.mxu0 %v257
    %269 = vmatpush.bf16.msra.mxu0 %v256
    %270 = vmatpush.bf16.msra.mxu0 %v255
    %271 = vmatpush.bf16.msra.mxu0 %v254
    %272 = vmatpush.bf16.msra.mxu0 %v253
    %273 = vmatpush.bf16.msra.mxu0 %v252
    %274 = vmatpush.bf16.msra.mxu0 %v251
    %275 = vmatmul.bf16.gmra.mxu0 %v198
    %v276 = vpop.f32.mrf.mxu0
    %v277 = vadd.f32 %v217, %v276
    %v278 = vpop.f32.mrf.mxu0
    %279 = vdwg.mxu0
    %vm280 = vcmp.gt.f32.partialorder %v277, 0.0
    %v281 = vmul.f32 %v277, 0.2
    %v282 = vsel %vm280, %v277, %v281
    %v283 = vpack.c.bf16 %v282, %v282
    %v284 = vld [vmem:[%s7] sm:$0xf]
    %v285 = vld [vmem:[%s7 + $0x4] sm:$0xf]
    %v286 = vld [vmem:[%s7 + $0x8] sm:$0xf]
    %v287 = vld [vmem:[%s7 + $0xc] sm:$0xf]
    %v288 = vld [vmem:[%s7 + $0x10] sm:$0xf]
    %v289 = vld [vmem:[%s7 + $0x14] sm:$0xf]
    %v290 = vld [vmem:[%s7 + $0x18] sm:$0xf]
    %v291 = vld [vmem:[%s7 + $0x1c] sm:$0xf]
    %v292 = vld [vmem:[%s7 + $0x20] sm:$0xf]
    %v293 = vld [vmem:[%s7 + $0x24] sm:$0xf]
    %v294 = vld [vmem:[%s7 + $0x28] sm:$0xf]
    %v295 = vld [vmem:[%s7 + $0x2c] sm:$0xf]
    %v296 = vld [vmem:[%s7 + $0x30] sm:$0xf]
    %v297 = vld [vmem:[%s7 + $0x34] sm:$0xf]
    %v298 = vld [vmem:[%s7 + $0x38] sm:$0xf]
    %v299 = vld [vmem:[%s7 + $0x3c] sm:$0xf]
    %v300 = vld [vmem:[%s8] sm:$0x1]
    %v302 = vperm.slane %v300, 0
    %v320 = vunpack.c.l.b16 %v284
    %v321 = vunpack.c.l.b16 %v285
    %v322 = vunpack.c.l.b16 %v286
    %v323 = vunpack.c.l.b16 %v287
    %v324 = vunpack.c.l.b16 %v288
    %v325 = vunpack.c.l.b16 %v289
    %v326 = vunpack.c.l.b16 %v290
    %v327 = vunpack.c.l.b16 %v291
    %v328 = vunpack.c.l.b16 %v292
    %v329 = vunpack.c.l.b16 %v293
    %v330 = vunpack.c.l.b16 %v294
    %v331 = vunpack.c.l.b16 %v295
    %v332 = vunpack.c.l.b16 %v296
    %v333 = vunpack.c.l.b16 %v297
    %v334 = vunpack.c.l.b16 %v298
    %v335 = vunpack.c.l.b16 %v299
    %v336 = vpack.c.b16 %v321, %v320
    %v337 = vpack.c.b16 %v323, %v322
    %v338 = vpack.c.b16 %v325, %v324
    %v339 = vpack.c.b16 %v327, %v326
    %v340 = vpack.c.b16 %v329, %v328
    %v341 = vpack.c.b16 %v331, %v330
    %v342 = vpack.c.b16 %v333, %v332
    %v343 = vpack.c.b16 %v335, %v334
    %352 = vmatpush.bf16.msra.mxu0 %v343
    %353 = vmatpush.bf16.msra.mxu0 %v342
    %354 = vmatpush.bf16.msra.mxu0 %v341
    %355 = vmatpush.bf16.msra.mxu0 %v340
    %356 = vmatpush.bf16.msra.mxu0 %v339
    %357 = vmatpush.bf16.msra.mxu0 %v338
    %358 = vmatpush.bf16.msra.mxu0 %v337
    %359 = vmatpush.bf16.msra.mxu0 %v336
    %360 = vmatmul.bf16.gmra.mxu0 %v283
    %v361 = vpop.f32.mrf.mxu0
    %v362 = vadd.f32 %v302, %v361
    %v363 = vpop.f32.mrf.mxu0
    %364 = vdwg.mxu0
    %vm365 = vcmask 64512
    %366 = vst.msk [vmem:[#allocation8] sm:$0xff] %vm365, %v362
    // Predicated region
    $region50: #{tpu_custom_call.1} parent=1 // pred_check
      _
    $region51: #{tpu_custom_call.1} parent=1 // pred_check_branch
      %368 = sbr.rel (0) target = $region53
    $region52: #{tpu_custom_call.1} parent=1 // pred_region
      %370 = vsyncadd [#allocation4], 0
      %s372 = sshll.u32 [#allocation8], 4
      %s373 = int_to_ptr.vmem [resolvable:$true] %s372
      %s374 = sshll.u32 %s9, 4
      %s375 = int_to_ptr.hbm [resolvable:$true] %s374
      %377 = dma.vmem_to_hbm [thread:$0]  %s373, 128, %s375, [#allocation4]
    $region53: #{tpu_custom_call.1} parent=1 // pred_fallthru
      _
    // Predicated region
    $region54: #{tpu_custom_call.1} parent=1 // pred_check
      _
    $region55: #{tpu_custom_call.1} parent=1 // pred_check_branch
      %379 = sbr.rel (0) target = $region57
    $region56: #{tpu_custom_call.1} parent=1 // pred_region
      %381 = dma.done [#allocation4], 128
    $region57: #{tpu_custom_call.1} parent=1 // pred_fallthru
      _
    %382 = vsyncpa [#allocation3], 1
    %383 = vsyncpa [#allocation6], 1
    %384 = vsyncpa [#allocation4], 1

</llo_original>
